<compile_context>
chip_gen: v7x
topology: tpu7x:2x2x1
jax: 0.10.0
libtpu: 0.0.40
codegen_flags: <defaults>
</compile_context>

<pallas_src>
import jax
import jax.numpy as jnp
from jax.experimental import pallas as pl
from jax.experimental.pallas import tpu as pltpu


# --------------------------------------------------------------------------
# Kernels
# --------------------------------------------------------------------------
def _num_embedding_kernel(x_ref, w_ref, o_ref):
    # x_ref: (bt, G*d_in)  w_ref: (G*d_in, G*d_out)  o_ref: (bt, G*d_out)
    o_ref[...] = jnp.dot(
        x_ref[...], w_ref[...], preferred_element_type=jnp.float32
    ).astype(o_ref.dtype)


def _num_embedding_bias_kernel(x_ref, w_ref, b_ref, o_ref):
    acc = jnp.dot(x_ref[...], w_ref[...], preferred_element_type=jnp.float32)
    acc = acc + b_ref[...].astype(jnp.float32)          # b_ref: (1, G*d_out)
    o_ref[...] = acc.astype(o_ref.dtype)


# --------------------------------------------------------------------------
# One-time weight preparation (module "init")
# --------------------------------------------------------------------------
def _choose_group(n, d_in, d_out, lane_target=256):
    """Smallest feature-group size G (< n) giving (8,128)-legal tiles; prefer
    G*d_out >= lane_target (fills v6e/v7x 256-wide MXU).  Fallback: G = n."""
    valid = [
        g for g in range(1, n)
        if n % g == 0 and (g * d_in) % 128 == 0 and (g * d_out) % 128 == 0
    ]
    if not valid:
        return n
    pref = [g for g in valid if g * d_out >= lane_target]
    return min(pref) if pref else min(valid)


def prepare_weights(weight, *, lane_target=256):
    """Build the (grouped) block-diagonal weight ONCE.

    Returns (w_bd, G) with w_bd: (n_groups, G*d_in, G*d_out) where
    w_bd[h, f*d_in+i, g*d_out+j] = (f==g) * weight[h*G+f, i, j].
    """
    n, d_in, d_out = weight.shape
    G = _choose_group(n, d_in, d_out, lane_target)
    n_groups = n // G
    wg = weight.reshape(n_groups, G, d_in, d_out)
    # Diagonal scatter (O(n*d_in*d_out) writes) instead of a dense n^2 einsum.
    w_bd = jnp.zeros((n_groups, G, d_in, G, d_out), weight.dtype)
    g = jnp.arange(G)
    w_bd = w_bd.at[:, g, :, g, :].set(jnp.moveaxis(wg, 1, 0))
    return w_bd.reshape(n_groups, G * d_in, G * d_out), G


# --------------------------------------------------------------------------
# Forward
# --------------------------------------------------------------------------
def _pick_bt(B, block_b):
    if B <= 8:
        return B
    bt = max(8, (min(block_b, B) // 8) * 8)
    # Keep >= 2 batch blocks when possible so v7x's two TensorCores both work.
    if B >= 16:
        half = max(8, ((B // 2) // 8) * 8)
        bt = min(bt, half)
    # Snap to a divisor of B (avoids ragged last tile) if it costs < 2x.
    if B % bt != 0:
        for cand in range(bt, max(8, bt // 2) - 1, -8):
            if B % cand == 0:
                return cand
    return bt


def num_embedding_fwd(x_num, w_bd, bias=None, *, d_out, block_b=1024):
    """x_num: (B, n, d_in); w_bd: (n_groups, G*d_in, G*d_out) from
    prepare_weights; bias: (n, d_out) or None."""
    assert x_num.ndim == 3
    B, n, d_in = x_num.shape
    n_groups, GdI, GdO = w_bd.shape
    G = GdI // d_in
    assert n_groups * G == n and GdO == G * d_out
    use_bias = bias is not None

    odt = jnp.result_type(x_num.dtype, w_bd.dtype)
    x2 = x_num.reshape(B, n * d_in)          # contiguous -> free reshape

    # ----- batch tile + per-generation VMEM budget -----------------------
    bt = _pick_bt(B, block_b)
    x_isz = x2.dtype.itemsize
    w_isz = w_bd.dtype.itemsize
    o_isz = jnp.dtype(odt).itemsize
    resident = GdI * GdO * w_isz + (GdO * bias.dtype.itemsize if use_bias else 0)
    res_factor = 1 if n_groups == 1 else 2   # constant index_map -> fetched once

    def _need(btile):
        return 2 * btile * (GdI * x_isz + GdO * o_isz) + res_factor * resident + (4 << 20)

    try:
        phys = pltpu.get_tpu_info().vmem_capacity_bytes
    except Exception:
        phys = 64 * 2 ** 20
    cap = int(phys) * 3 // 4                 # ~48 MiB v7x, ~96 MiB v5e/v6e
    while _need(bt) > cap and bt > 8:
        bt = max(8, ((bt // 2) // 8) * 8)
    vmem_limit = int(min(cap, max(32 * 2 ** 20, _need(bt))))

    nb = pl.cdiv(B, bt)

    # ----- specs ----------------------------------------------------------
    in_specs = [
        pl.BlockSpec((bt, GdI), lambda g, b: (b, g)),          # streamed x tile
        pl.BlockSpec((None, GdI, GdO), lambda g, b: (g, 0, 0)),  # weight group
    ]
    operands = [x2, w_bd]
    if use_bias:
        in_specs.append(pl.BlockSpec((None, 1, GdO), lambda g, b: (g, 0, 0)))
        operands.append(bias.reshape(n_groups, 1, GdO))
        kernel = _num_embedding_bias_kernel
    else:
        kernel = _num_embedding_kernel
    out_spec = pl.BlockSpec((bt, GdO), lambda g, b: (b, g))

    # ----- cost hint for XLA scheduling -----------------------------------
    bytes_accessed = (
        x2.size * x_isz
        + w_bd.size * w_isz
        + (bias.size * bias.dtype.itemsize if use_bias else 0)
        + B * n * d_out * o_isz
    )
    cost = pl.CostEstimate(
        flops=2 * B * n_groups * GdI * GdO,
        transcendentals=0,
        bytes_accessed=bytes_accessed,
    )

    out_f = pl.pallas_call(
        kernel,
        out_shape=jax.ShapeDtypeStruct((B, n * d_out), odt),
        grid=(n_groups, nb),                 # groups outer (weight reuse), batch inner
        in_specs=in_specs,
        out_specs=out_spec,
        compiler_params=pltpu.CompilerParams(
            dimension_semantics=("parallel", "parallel"),
            vmem_limit_bytes=vmem_limit,
        ),
        cost_estimate=cost,
    )(*operands)

    return out_f.reshape(B, n, d_out)


# --------------------------------------------------------------------------
# Demo / correctness check
# --------------------------------------------------------------------------
if __name__ == "__main__":
    B, n, d_in, d_out = 256, 4, 8, 32
    key = jax.random.PRNGKey(0)
    kx, kw, kb = jax.random.split(key, 3)

    x_num = jax.random.normal(kx, (B, n, d_in), jnp.float32)
    bound = 1.0 / (d_in ** 0.5)               # nn.Linear-style init, weight as (n, d_in, d_out)
    weight = jax.random.uniform(kw, (n, d_in, d_out), jnp.float32, -bound, bound)
    bias = jax.random.uniform(kb, (n, d_out), jnp.float32, -bound, bound)

    # One-time init (mirrors nn.Module __init__): block-diagonal weight build.
    w_bd, G = prepare_weights(weight)

    fwd = jax.jit(num_embedding_fwd, static_argnames=("d_out", "block_b"))

    for use_bias in (False, True):
        out = fwd(x_num, w_bd, bias if use_bias else None, d_out=d_out, block_b=1024)
        out = jax.block_until_ready(out)

        ref = jnp.einsum("bfi,fij->bfj", x_num, weight)
        if use_bias:
            ref = ref + bias[None]
        assert out.shape == (B, n, d_out)
        assert jnp.allclose(out, ref, atol=1e-4, rtol=1e-4), float(
            jnp.max(jnp.abs(out - ref))
        )

    print("KERNEL_OK")
</pallas_src>

<mosaic_0001>
module attributes {stable_mosaic.version = 11 : i64} {
  func.func @_num_embedding_kernel(%arg0: i32, %arg1: i32, %arg2: memref<128x32xf32, #tpu.memory_space<vmem>>, %arg3: memref<1x32x128xf32, #tpu.memory_space<vmem>>, %arg4: memref<128x128xf32, #tpu.memory_space<vmem>>) attributes {dimension_semantics = [#tpu.dimension_semantics<parallel>, #tpu.dimension_semantics<parallel>], iteration_bounds = array<i64: 1, 2>, scalar_prefetch = 0 : i64, scratch_operands = 0 : i64, tpu.core_type = #tpu.core_type<tc>, window_params = [{transform_indices = @transform_0, window_bounds = array<i64: 128, 32>}, {transform_indices = @transform_1, window_bounds = array<i64: 1, 32, 128>}, {transform_indices = @transform_2, window_bounds = array<i64: 128, 128>}]} {
    %c0 = arith.constant 0 : index
    %c0_0 = arith.constant 0 : index
    %0 = vector.load %arg2[%c0, %c0_0] : memref<128x32xf32, #tpu.memory_space<vmem>>, vector<128x32xf32>
    %c0_1 = arith.constant 0 : index
    %c0_2 = arith.constant 0 : index
    %c0_3 = arith.constant 0 : index
    %1 = vector.load %arg3[%c0_1, %c0_2, %c0_3] : memref<1x32x128xf32, #tpu.memory_space<vmem>>, vector<1x32x128xf32>
    %2 = vector.shape_cast %1 : vector<1x32x128xf32> to vector<32x128xf32>
    %cst = arith.constant dense<0.000000e+00> : vector<128x128xf32>
    %3 = tpu.matmul %0, %2, %cst {dimension_numbers = #tpu.dot_dimension_numbers<[1], [0], [0], [1], [0, 0, 1, 1], [], []>} : vector<128x32xf32>, vector<32x128xf32>, vector<128x128xf32> -> vector<128x128xf32>
    %c0_4 = arith.constant 0 : index
    %c0_5 = arith.constant 0 : index
    %4 = vector.load %arg4[%c0_4, %c0_5] : memref<128x128xf32, #tpu.memory_space<vmem>>, vector<128x128xf32>
    tpu.vector_store %arg4[%c0_4, %c0_5], %3 {strides = array<i32>} : memref<128x128xf32, #tpu.memory_space<vmem>>, vector<128x128xf32>,
    return
  }
  func.func @transform_0(%arg0: i32, %arg1: i32) -> (i32, i32) {
    %c0_i32 = arith.constant 0 : i32
    return %arg1, %arg0 : i32, i32
  }
  func.func @transform_1(%arg0: i32, %arg1: i32) -> (i32, i32, i32) {
    %c0_i32 = arith.constant 0 : i32
    %c0_i32_0 = arith.constant 0 : i32
    %c0_i32_1 = arith.constant 0 : i32
    return %arg0, %c0_i32, %c0_i32_0 : i32, i32, i32
  }
  func.func @transform_2(%arg0: i32, %arg1: i32) -> (i32, i32) {
    %c0_i32 = arith.constant 0 : i32
    return %arg1, %arg0 : i32, i32
  }
}

</mosaic_0001>

<llo_original>
// kernel: num_embedding_fwd.1
$region0: #{num_embedding_fwd.1}
  #allocation0 [shape = 'u32[]', space=smem, size = 0x4, offset = 0x4, fixed_abs, tag = 'smem constant byte address 0x4 - core index']
  #allocation1 [shape = 'u32[144,128]{1,0:T(1,128)}', space=vmem, size = 0x12000, scoped, tag = 'internal scratch']
  %s0 = inlined_call_operand.vmem [shape: f32[256,32], index: 0, kind: input, shape index: {}]
  %s1 = inlined_call_operand.vmem [shape: f32[1,32,128], index: 1, kind: input, shape index: {}]
  %s2 = inlined_call_operand.vmem [shape: f32[256,128], index: 2, kind: output, shape index: {}]
  %s3 = sld [smem:[#allocation0]]
  $region41: #{num_embedding_fwd.1} parent=0
    _
  %s5 = ssub.s32 1, %s3
  %s6 = scalar_select 0, %s5, %s3
  loop: start=0, step=1, limit=4
  $region2: #{num_embedding_fwd.1} parent=0 // loop_pre_header
    _
  $region3: #{num_embedding_fwd.1} parent=0 // loop_header
    %s8 = sphi 0, %s12
    %p9 = scmp.ge.s32.totalorder %s8, 4
    %s15 = sphi 0, %s27
    %s16 = sphi 0, %s23
    %s17 = sphi 0, %s15
    %s18 = sphi 0, %s16
    %s19 = sphi 0, %s17
    %s20 = sphi 0, %s18
    %s32 = sphi 0, %s34
    %s35 = sphi 0, %s32
    %s36 = sphi 0, %s35
    %s52 = sphi 0, %s36
    %s58 = sphi 0, %s60
    %s61 = sphi 0, %s58
    %s62 = sphi 0, %s61
    %s78 = sphi 0, %s62
    %s86 = sphi 0, %s88
    %s89 = sphi 0, %s86
    %s90 = sphi 0, %s89
    %s106 = sphi 0, %s90
  $region4: #{num_embedding_fwd.1} parent=0 // loop_header_branch
    %11 = sbr.rel (%p9) target = $region8
  $region5: #{num_embedding_fwd.1} parent=0 // loop_body
    %s13 = ssub.s32 %s8, 1
    %s14 = ssub.s32 %s8, 2
    %s21 = sadd.s32 1, %s16
    %p22 = scmp.ge.s32.totalorder %s21, 2
    %s23 = scalar_select %p22, 0, %s21
    %s24 = sadd.s32 1, %s15
    %s25 = scalar_select %p22, %s24, %s15
    %p26 = scmp.ge.s32.totalorder %s25, 1
    %s27 = scalar_select %p26, 0, %s25
    %s28 = ssub.s32 %s16, %s23
    %s29 = ssub.s32 %s15, %s27
    %s30 = sor.u32 %s28, %s29
    %p31 = scmp.eq.s32.totalorder %s30, 0
    %s33 = sadd.s32 %s32, 1
    %s34 = scalar_select %p31, %s32, %s33
    %p37 = pneg %p31
    %p38 = scmp.eq.s32.totalorder %s8, 1
    %p39 = por %p37, %p38
    %p40 = scmp.ne.s32.totalorder %s32, %s35
    %p41 = scmp.eq.s32.totalorder %s8, 0
    %p42 = por %p40, %p41
    %p43 = scmp.ne.s32.totalorder %s32, %s35
    %p44 = scmp.eq.s32.totalorder %s13, 1
    %p45 = por %p43, %p44
    %p46 = scmp.ne.s32.totalorder %s35, %s36
    %p47 = scmp.eq.s32.totalorder %s13, 0
    %p48 = por %p46, %p47
    %p49 = scmp.ne.s32.totalorder %s35, %s36
    %p50 = scmp.eq.s32.totalorder %s14, 1
    %p51 = por %p49, %p50
    %p53 = scmp.ne.s32.totalorder %s36, %s52
    %p54 = scmp.eq.s32.totalorder %s14, 0
    %p55 = por %p53, %p54
    %s56 = ssub.s32 %s15, %s27
    %p57 = scmp.eq.s32.totalorder %s56, 0
    %s59 = sadd.s32 %s58, 1
    %s60 = scalar_select %p57, %s58, %s59
    %p63 = pneg %p57
    %p64 = scmp.eq.s32.totalorder %s8, 1
    %p65 = por %p63, %p64
    %p66 = scmp.ne.s32.totalorder %s58, %s61
    %p67 = scmp.eq.s32.totalorder %s8, 0
    %p68 = por %p66, %p67
    %p69 = scmp.ne.s32.totalorder %s58, %s61
    %p70 = scmp.eq.s32.totalorder %s13, 1
    %p71 = por %p69, %p70
    %p72 = scmp.ne.s32.totalorder %s61, %s62
    %p73 = scmp.eq.s32.totalorder %s13, 0
    %p74 = por %p72, %p73
    %p75 = scmp.ne.s32.totalorder %s61, %s62
    %p76 = scmp.eq.s32.totalorder %s14, 1
    %p77 = por %p75, %p76
    %p79 = scmp.ne.s32.totalorder %s62, %s78
    %p80 = scmp.eq.s32.totalorder %s14, 0
    %p81 = por %p79, %p80
    %s82 = ssub.s32 %s16, %s23
    %s83 = ssub.s32 %s15, %s27
    %s84 = sor.u32 %s82, %s83
    %p85 = scmp.eq.s32.totalorder %s84, 0
    %s87 = sadd.s32 %s86, 1
    %s88 = scalar_select %p85, %s86, %s87
    %p91 = pneg %p85
    %p92 = scmp.eq.s32.totalorder %s8, 1
    %p93 = por %p91, %p92
    %p94 = scmp.ne.s32.totalorder %s86, %s89
    %p95 = scmp.eq.s32.totalorder %s8, 0
    %p96 = por %p94, %p95
    %p97 = scmp.ne.s32.totalorder %s86, %s89
    %p98 = scmp.eq.s32.totalorder %s13, 1
    %p99 = por %p97, %p98
    %p100 = scmp.ne.s32.totalorder %s89, %s90
    %p101 = scmp.eq.s32.totalorder %s13, 0
    %p102 = por %p100, %p101
    %p103 = scmp.ne.s32.totalorder %s89, %s90
    %p104 = scmp.eq.s32.totalorder %s14, 1
    %p105 = por %p103, %p104
    %p107 = scmp.ne.s32.totalorder %s90, %s106
    %p108 = scmp.eq.s32.totalorder %s14, 0
    %p109 = por %p107, %p108
    %p110 = scmp.le.s32.totalorder 1, %s8
    %p111 = scmp.lt.s32.totalorder %s8, 3
    %p112 = pnand %p110, %p111
    %p113 = pneg %p112
    // Predicated region
    $region9: #{num_embedding_fwd.1} parent=5 // pred_check
      _
    $region10: #{num_embedding_fwd.1} parent=5 // pred_check_branch
      %115 = sbr.rel (%p112) target = $region12
    $region11: #{num_embedding_fwd.1} parent=5 // pred_region
      %s116 = ssub.s32 %s8, 1
      // Predicated region
      $region13: #{num_embedding_fwd.1} parent=11 // pred_check
        %p117 = pneg %p74
      $region14: #{num_embedding_fwd.1} parent=11 // pred_check_branch
        %119 = sbr.rel (%p117) target = $region16
      $region15: #{num_embedding_fwd.1} parent=11 // pred_region
        %p120 = scmp.lt.s32.totalorder %s17, 0
        %s121 = scalar_select %p120, %s17, 0
        %s122 = smul.addr %s121, 4
        %s123 = smul.addr %s122, 8
        %s124 = scalar_lea.vmem %s1, %s123
      $region16: #{num_embedding_fwd.1} parent=11 // pred_fallthru
        _
    $region12: #{num_embedding_fwd.1} parent=5 // pred_fallthru
      _
    %p125 = scmp.lt.s32.totalorder %s8, 2
    // Predicated region
    $region17: #{num_embedding_fwd.1} parent=5 // pred_check
      %p126 = pneg %p125
    $region18: #{num_embedding_fwd.1} parent=5 // pred_check_branch
      %128 = sbr.rel (%p126) target = $region20
    $region19: #{num_embedding_fwd.1} parent=5 // pred_region
      // Predicated region
      $region21: #{num_embedding_fwd.1} parent=19 // pred_check
        %p129 = pneg %p42
      $region22: #{num_embedding_fwd.1} parent=19 // pred_check_branch
        %131 = sbr.rel (%p129) target = $region24
      $region23: #{num_embedding_fwd.1} parent=19 // pred_region
        %s132 = smul.u32 16, %s16
        %p133 = scmp.lt.s32.totalorder %s132, 31
        %s134 = scalar_select %p133, %s132, 31
        %p135 = scmp.lt.s32.totalorder %s15, 0
        %s136 = scalar_select %p135, %s15, 0
        %s137 = sadd.s32 %s136, %s134
        %s138 = smul.addr %s137, 8
        %s139 = scalar_lea.vmem %s0, %s138
        %s140 = smul.u32 16, %s16
      $region24: #{num_embedding_fwd.1} parent=19 // pred_fallthru
        _
    $region20: #{num_embedding_fwd.1} parent=5 // pred_fallthru
      _
    %p141 = scmp.le.s32.totalorder 1, %s8
    %p142 = scmp.lt.s32.totalorder %s8, 3
    %p143 = pnand %p141, %p142
    %p144 = pneg %p143
    // Predicated region
    $region25: #{num_embedding_fwd.1} parent=5 // pred_check
      _
    $region26: #{num_embedding_fwd.1} parent=5 // pred_check_branch
      %146 = sbr.rel (%p143) target = $region28
    $region27: #{num_embedding_fwd.1} parent=5 // pred_region
      %s147 = ssub.s32 %s8, 1
      %s148 = smul.u32 16, %s18
      %p149 = scmp.lt.s32.totalorder %s148, 31
      %s150 = scalar_select %p149, %s148, 31
      %p151 = scmp.lt.s32.totalorder %s17, 0
      %s152 = scalar_select %p151, %s17, 0
      %s153 = sadd.s32 %s152, %s150
      %s154 = smul.addr %s153, 8
      %s155 = scalar_lea.vmem %s0, %s154
      %p156 = pneg %p48
      %p157 = pneg %p45
      %p158 = scmp.lt.s32.totalorder %s17, 0
      %s159 = scalar_select %p158, %s17, 0
      %s160 = smul.addr %s159, 4
      %s161 = smul.addr %s160, 8
      %s162 = scalar_lea.vmem %s1, %s161
      %p163 = pneg %p74
      %p164 = pneg %p71
      %p165 = pneg %p102
      %p166 = pneg %p99
      %s167 = smul.u32 16, %s18
      %p168 = scmp.lt.s32.totalorder %s167, 31
      %s169 = scalar_select %p168, %s167, 31
      %p170 = scmp.lt.s32.totalorder %s17, 0
      %s171 = scalar_select %p170, %s17, 0
      %s172 = sadd.s32 %s171, %s169
      %s173 = smul.addr %s172, 8
      %s174 = scalar_lea.vmem %s2, %s173
      %s175 = smul.u32 16, %s18
      %p176 = scmp.lt.s32.totalorder %s175, 31
      %s177 = scalar_select %p176, %s175, 31
      %p178 = scmp.lt.s32.totalorder %s17, 0
      %s179 = scalar_select %p178, %s17, 0
      %s180 = sadd.s32 %s179, %s177
      %s181 = smul.addr %s180, 8
      %s182 = scalar_lea.vmem %s0, %s181
      %s183 = smul.u32 16, %s18
      %p184 = scmp.lt.s32.totalorder %s17, 0
      %s185 = scalar_select %p184, %s17, 0
      %s186 = smul.addr %s185, 4
      %s187 = smul.addr %s186, 8
      %s188 = scalar_lea.vmem %s1, %s187
      %s189 = smul.u32 16, %s18
      %p190 = scmp.lt.s32.totalorder %s189, 31
      %s191 = scalar_select %p190, %s189, 31
      %p192 = scmp.lt.s32.totalorder %s17, 0
      %s193 = scalar_select %p192, %s17, 0
      %s194 = sadd.s32 %s193, %s191
      %s195 = smul.addr %s194, 8
      %s196 = scalar_lea.vmem %s2, %s195
      %s197 = smul.u32 16, %s18
      %v198 = vld [vmem:[%s182] sm:$0xff]
      %v199 = vld [vmem:[%s182 + $0x8] sm:$0xff]
      %v200 = vld [vmem:[%s182 + $0x10] sm:$0xff]
      %v201 = vld [vmem:[%s182 + $0x18] sm:$0xff]
      %v202 = vld [vmem:[%s182 + $0x20] sm:$0xff]
      %v203 = vld [vmem:[%s182 + $0x28] sm:$0xff]
      %v204 = vld [vmem:[%s182 + $0x30] sm:$0xff]
      %v205 = vld [vmem:[%s182 + $0x38] sm:$0xff]
      %v206 = vld [vmem:[%s182 + $0x40] sm:$0xff]
      %v207 = vld [vmem:[%s182 + $0x48] sm:$0xff]
      %v208 = vld [vmem:[%s182 + $0x50] sm:$0xff]
      %v209 = vld [vmem:[%s182 + $0x58] sm:$0xff]
      %v210 = vld [vmem:[%s182 + $0x60] sm:$0xff]
      %v211 = vld [vmem:[%s182 + $0x68] sm:$0xff]
      %v212 = vld [vmem:[%s182 + $0x70] sm:$0xff]
      %v213 = vld [vmem:[%s182 + $0x78] sm:$0xff]
      %v214 = vld [vmem:[%s188] sm:$0xff]
      %v215 = vld [vmem:[%s188 + $0x8] sm:$0xff]
      %v216 = vld [vmem:[%s188 + $0x10] sm:$0xff]
      %v217 = vld [vmem:[%s188 + $0x18] sm:$0xff]
      %vm218 = vcmask 261120
      %v220 = vsel %vm218, %v198, 0
      %v223 = vsel %vm218, %v199, 0
      %v226 = vsel %vm218, %v200, 0
      %v229 = vsel %vm218, %v201, 0
      %v232 = vsel %vm218, %v202, 0
      %v235 = vsel %vm218, %v203, 0
      %v238 = vsel %vm218, %v204, 0
      %v241 = vsel %vm218, %v205, 0
      %v244 = vsel %vm218, %v206, 0
      %v247 = vsel %vm218, %v207, 0
      %v250 = vsel %vm218, %v208, 0
      %v253 = vsel %vm218, %v209, 0
      %v256 = vsel %vm218, %v210, 0
      %v259 = vsel %vm218, %v211, 0
      %v262 = vsel %vm218, %v212, 0
      %v265 = vsel %vm218, %v213, 0
      %267 = vmatprep.subr.mxu0 0.0
      %268 = vmatpush1.msra.mxu0 %v214
      %269 = vmatprep.subr.mxu0 0.0
      %270 = vmatpush1.msra.mxu0 %v215
      %271 = vmatprep.subr.mxu0 0.0
      %272 = vmatpush1.msra.mxu0 %v216
      %273 = vmatprep.subr.mxu0 0.0
      %274 = vmatpush1.msra.mxu0 %v217
      %275 = vmatprep.subr.mxu0 0.0
      %276 = vmatpush1.msra.mxu0 0.0
      %277 = vmatprep.subr.mxu0 0.0
      %278 = vmatpush1.msra.mxu0 0.0
      %279 = vmatprep.subr.mxu0 0.0
      %280 = vmatpush1.msra.mxu0 0.0
      %281 = vmatprep.subr.mxu0 0.0
      %282 = vmatpush1.msra.mxu0 0.0
      %283 = vmatprep.subr.mxu0 0.0
      %284 = vmatpush1.msra.mxu0 0.0
      %285 = vmatprep.subr.mxu0 0.0
      %286 = vmatpush1.msra.mxu0 0.0
      %287 = vmatprep.subr.mxu0 0.0
      %288 = vmatpush1.msra.mxu0 0.0
      %289 = vmatprep.subr.mxu0 0.0
      %290 = vmatpush1.msra.mxu0 0.0
      %291 = vmatprep.subr.mxu0 0.0
      %292 = vmatpush1.msra.mxu0 0.0
      %293 = vmatprep.subr.mxu0 0.0
      %294 = vmatpush1.msra.mxu0 0.0
      %295 = vmatprep.subr.mxu0 0.0
      %296 = vmatpush1.msra.mxu0 0.0
      %297 = vmatprep.subr.mxu0 0.0
      %298 = vmatpush1.msra.mxu0 0.0
      %299 = vmatprep.subr.mxu0 0.0
      %300 = vmatpush1.msra.mxu0 0.0
      %301 = vmatprep.subr.mxu0 0.0
      %302 = vmatpush1.msra.mxu0 0.0
      %303 = vmatprep.subr.mxu0 0.0
      %304 = vmatpush1.msra.mxu0 0.0
      %305 = vmatprep.subr.mxu0 0.0
      %306 = vmatpush1.msra.mxu0 0.0
      %307 = vmatprep.subr.mxu0 0.0
      %308 = vmatpush1.msra.mxu0 0.0
      %309 = vmatprep.subr.mxu0 0.0
      %310 = vmatpush1.msra.mxu0 0.0
      %311 = vmatprep.subr.mxu0 0.0
      %312 = vmatpush1.msra.mxu0 0.0
      %313 = vmatprep.subr.mxu0 0.0
      %314 = vmatpush1.msra.mxu0 0.0
      %315 = vmatprep.subr.mxu0 0.0
      %316 = vmatpush1.msra.mxu0 0.0
      %317 = vmatprep.subr.mxu0 0.0
      %318 = vmatpush1.msra.mxu0 0.0
      %319 = vmatprep.subr.mxu0 0.0
      %320 = vmatpush1.msra.mxu0 0.0
      %321 = vmatprep.subr.mxu0 0.0
      %322 = vmatpush1.msra.mxu0 0.0
      %323 = vmatprep.subr.mxu0 0.0
      %324 = vmatpush1.msra.mxu0 0.0
      %325 = vmatprep.subr.mxu0 0.0
      %326 = vmatpush1.msra.mxu0 0.0
      %327 = vmatprep.subr.mxu0 0.0
      %328 = vmatpush1.msra.mxu0 0.0
      %329 = vmatprep.subr.mxu0 0.0
      %330 = vmatpush1.msra.mxu0 0.0
      %331 = vmatprep.mubr.f32.mxu0 0.0
      %332 = vmatmul.mubr.f32.gmra.mrb[0].mxu0 %v220
      %v333 = vpop.f32.mrb[0].mxu0
      %v334 = vadd.f32 0.0, %v333
      %v335 = vpop.f32.mrb[0].mxu0
      %336 = vmatprep.mubr.f32.mxu0 0.0
      %337 = vmatmul.mubr.f32.gmra.mrb[0].mxu0 %v223
      %v338 = vpop.f32.mrb[0].mxu0
      %v339 = vadd.f32 0.0, %v338
      %v340 = vpop.f32.mrb[0].mxu0
      %341 = vmatprep.mubr.f32.mxu0 0.0
      %342 = vmatmul.mubr.f32.gmra.mrb[0].mxu0 %v226
      %v343 = vpop.f32.mrb[0].mxu0
      %v344 = vadd.f32 0.0, %v343
      %v345 = vpop.f32.mrb[0].mxu0
      %346 = vmatprep.mubr.f32.mxu0 0.0
      %347 = vmatmul.mubr.f32.gmra.mrb[0].mxu0 %v229
      %v348 = vpop.f32.mrb[0].mxu0
      %v349 = vadd.f32 0.0, %v348
      %v350 = vpop.f32.mrb[0].mxu0
      %351 = vmatprep.mubr.f32.mxu0 0.0
      %352 = vmatmul.mubr.f32.gmra.mrb[0].mxu0 %v232
      %v353 = vpop.f32.mrb[0].mxu0
      %v354 = vadd.f32 0.0, %v353
      %v355 = vpop.f32.mrb[0].mxu0
      %356 = vmatprep.mubr.f32.mxu0 0.0
      %357 = vmatmul.mubr.f32.gmra.mrb[0].mxu0 %v235
      %v358 = vpop.f32.mrb[0].mxu0
      %v359 = vadd.f32 0.0, %v358
      %v360 = vpop.f32.mrb[0].mxu0
      %361 = vmatprep.mubr.f32.mxu0 0.0
      %362 = vmatmul.mubr.f32.gmra.mrb[0].mxu0 %v238
      %v363 = vpop.f32.mrb[0].mxu0
      %v364 = vadd.f32 0.0, %v363
      %v365 = vpop.f32.mrb[0].mxu0
      %366 = vmatprep.mubr.f32.mxu0 0.0
      %367 = vmatmul.mubr.f32.gmra.mrb[0].mxu0 %v241
      %v368 = vpop.f32.mrb[0].mxu0
      %v369 = vadd.f32 0.0, %v368
      %v370 = vpop.f32.mrb[0].mxu0
      %371 = vmatprep.mubr.f32.mxu0 0.0
      %372 = vmatmul.mubr.f32.gmra.mrb[0].mxu0 %v244
      %v373 = vpop.f32.mrb[0].mxu0
      %v374 = vadd.f32 0.0, %v373
      %v375 = vpop.f32.mrb[0].mxu0
      %376 = vmatprep.mubr.f32.mxu0 0.0
      %377 = vmatmul.mubr.f32.gmra.mrb[0].mxu0 %v247
      %v378 = vpop.f32.mrb[0].mxu0
      %v379 = vadd.f32 0.0, %v378
      %v380 = vpop.f32.mrb[0].mxu0
      %381 = vmatprep.mubr.f32.mxu0 0.0
      %382 = vmatmul.mubr.f32.gmra.mrb[0].mxu0 %v250
      %v383 = vpop.f32.mrb[0].mxu0
      %v384 = vadd.f32 0.0, %v383
      %v385 = vpop.f32.mrb[0].mxu0
      %386 = vmatprep.mubr.f32.mxu0 0.0
      %387 = vmatmul.mubr.f32.gmra.mrb[0].mxu0 %v253
      %v388 = vpop.f32.mrb[0].mxu0
      %v389 = vadd.f32 0.0, %v388
      %v390 = vpop.f32.mrb[0].mxu0
      %391 = vmatprep.mubr.f32.mxu0 0.0
      %392 = vmatmul.mubr.f32.gmra.mrb[0].mxu0 %v256
      %v393 = vpop.f32.mrb[0].mxu0
      %v394 = vadd.f32 0.0, %v393
      %v395 = vpop.f32.mrb[0].mxu0
      %396 = vmatprep.mubr.f32.mxu0 0.0
      %397 = vmatmul.mubr.f32.gmra.mrb[0].mxu0 %v259
      %v398 = vpop.f32.mrb[0].mxu0
      %v399 = vadd.f32 0.0, %v398
      %v400 = vpop.f32.mrb[0].mxu0
      %401 = vmatprep.mubr.f32.mxu0 0.0
      %402 = vmatmul.mubr.f32.gmra.mrb[0].mxu0 %v262
      %v403 = vpop.f32.mrb[0].mxu0
      %v404 = vadd.f32 0.0, %v403
      %v405 = vpop.f32.mrb[0].mxu0
      %406 = vmatprep.mubr.f32.mxu0 0.0
      %407 = vmatmul.mubr.f32.gmra.mrb[0].mxu0 %v265
      %v408 = vpop.f32.mrb[0].mxu0
      %v409 = vadd.f32 0.0, %v408
      %v410 = vpop.f32.mrb[0].mxu0
      %411 = vdwg.mxu0
      %412 = vst [vmem:[%s196] sm:$0xff] %v334
      %413 = vst [vmem:[%s196 + $0x8] sm:$0xff] %v339
      %414 = vst [vmem:[%s196 + $0x10] sm:$0xff] %v344
      %415 = vst [vmem:[%s196 + $0x18] sm:$0xff] %v349
      %416 = vst [vmem:[%s196 + $0x20] sm:$0xff] %v354
      %417 = vst [vmem:[%s196 + $0x28] sm:$0xff] %v359
      %418 = vst [vmem:[%s196 + $0x30] sm:$0xff] %v364
      %419 = vst [vmem:[%s196 + $0x38] sm:$0xff] %v369
      %420 = vst [vmem:[%s196 + $0x40] sm:$0xff] %v374
      %421 = vst [vmem:[%s196 + $0x48] sm:$0xff] %v379
      %422 = vst [vmem:[%s196 + $0x50] sm:$0xff] %v384
      %423 = vst [vmem:[%s196 + $0x58] sm:$0xff] %v389
      %424 = vst [vmem:[%s196 + $0x60] sm:$0xff] %v394
      %425 = vst [vmem:[%s196 + $0x68] sm:$0xff] %v399
      %426 = vst [vmem:[%s196 + $0x70] sm:$0xff] %v404
      %427 = vst [vmem:[%s196 + $0x78] sm:$0xff] %v409
      %s428 = smul.u32 16, %s18
      %p429 = scmp.lt.s32.totalorder %s428, 31
      %s430 = scalar_select %p429, %s428, 31
      %p431 = scmp.lt.s32.totalorder %s17, 0
      %s432 = scalar_select %p431, %s17, 0
      %s433 = sadd.s32 %s432, %s430
      %s434 = smul.addr %s433, 8
      %s435 = scalar_lea.vmem %s2, %s434
      // Predicated region
      $region29: #{num_embedding_fwd.1} parent=27 // pred_check
        %p436 = pneg %p99
      $region30: #{num_embedding_fwd.1} parent=27 // pred_check_branch
        %438 = sbr.rel (%p436) target = $region32
      $region31: #{num_embedding_fwd.1} parent=27 // pred_region
        %s439 = smul.u32 16, %s18
      $region32: #{num_embedding_fwd.1} parent=27 // pred_fallthru
        _
    $region28: #{num_embedding_fwd.1} parent=5 // pred_fallthru
      _
    %p440 = scmp.le.s32.totalorder 2, %s8
    // Predicated region
    $region33: #{num_embedding_fwd.1} parent=5 // pred_check
      %p441 = pneg %p440
    $region34: #{num_embedding_fwd.1} parent=5 // pred_check_branch
      %443 = sbr.rel (%p441) target = $region36
    $region35: #{num_embedding_fwd.1} parent=5 // pred_region
      %s444 = ssub.s32 %s8, 2
      // Predicated region
      $region37: #{num_embedding_fwd.1} parent=35 // pred_check
        %p445 = pneg %p105
      $region38: #{num_embedding_fwd.1} parent=35 // pred_check_branch
        %447 = sbr.rel (%p445) target = $region40
      $region39: #{num_embedding_fwd.1} parent=35 // pred_region
        %s448 = smul.u32 16, %s20
        %p449 = scmp.lt.s32.totalorder %s448, 31
        %s450 = scalar_select %p449, %s448, 31
        %p451 = scmp.lt.s32.totalorder %s19, 0
        %s452 = scalar_select %p451, %s19, 0
        %s453 = sadd.s32 %s452, %s450
        %s454 = smul.addr %s453, 8
        %s455 = scalar_lea.vmem %s2, %s454
      $region40: #{num_embedding_fwd.1} parent=35 // pred_fallthru
        _
    $region36: #{num_embedding_fwd.1} parent=5 // pred_fallthru
      _
  $region6: #{num_embedding_fwd.1} parent=0 // loop_footer
    %s12 = sadd.s32 1, %s8
  $region7: #{num_embedding_fwd.1} parent=0 // loop_footer_branch
    %7 = sbr.rel target = $region3
  $region8: #{num_embedding_fwd.1} parent=0 // loop_exit
    _

</llo_original>
